<compile_context>
chip_gen: v7x
topology: tpu7x:2x2x1
jax: 0.10.0
libtpu: 0.0.40
codegen_flags: <defaults>
</compile_context>

<pallas_src>
import functools

import jax
import jax.numpy as jnp
from jax.experimental import pallas as pl
from jax.experimental.pallas import tpu as pltpu

# ----------------------------------------------------------------------------
# Deterministic "display / metric" parameters (synthetic, fixed in-script).
# ----------------------------------------------------------------------------
L_PEAK = 200.0       # cd/m^2, standard_4k-like peak luminance
L_BLACK = 0.2        # cd/m^2, black level
GAMMA = 2.2          # display EOTF exponent
BETA = 3.5           # Minkowski pooling exponent
W_ACH, W_RG, W_YB = 1.0, 0.35, 0.35   # channel weights (W_ACH==1.0 -> no mul)
JOD_A = 0.5          # JOD regression scale
JOD_EXP = 0.8        # JOD regression exponent

_LANE = 128
_CHUNK_ROWS = 32                 # rows per inner-loop step: 4 f32 / 2 bf16 vregs
# per-operand input block <= ~3 MiB  ->  2 ops * 2 pipeline buffers ~= 12 MiB,
# comfortably inside v7x's 64 MiB VMEM (32 MiB default scoped) as well as v5e/v6e.
_MAX_TILE_ROWS_NARROW = 4096     # bf16/fp16 inputs
_MAX_TILE_ROWS_F32 = 2048        # f32 inputs


def _round_up(x, m):
    return ((x + m - 1) // m) * m


def _eotf_dtype():
    """bf16 transcendentals roughly double EUP throughput on v6e/v7x; v5e and
    older chips have no bf16 VPU/EUP path, so stay in f32 there."""
    try:
        kind = jax.devices()[0].device_kind.lower()
    except Exception:
        return jnp.float32
    for old in ("v2", "v3", "v4", "v5"):
        if old in kind:
            return jnp.float32
    return jnp.bfloat16


def _make_kernel(eotf_dtype):
    def kernel(pred_ref, targ_ref, out_ref):
        """One grid step == one (frame, pixel-tile).

        pred_ref / targ_ref : (1, 3, tile_rows, 128) VMEM blocks.
        out_ref             : (1, 1, 32, 128) weighted beta-power partial sums.
        """
        tile_rows = pred_ref.shape[2]
        n_chunks = tile_rows // _CHUNK_ROWS

        def display(x):
            # EOTF: display luminance from [0, 1] code values; x^2.2 as one
            # exp/log pair.  The 1e-12 clamp keeps x == 0 at ~exact black
            # (exp(2.2*log(1e-12)) ~ 4e-27 -> L_BLACK).
            xc = jnp.clip(x.astype(eotf_dtype), 0.0, 1.0)
            lum = jnp.exp(GAMMA * jnp.log(jnp.maximum(xc, 1e-12)))
            # Back to f32 before anything that feeds a pred-target difference.
            return (L_PEAK - L_BLACK) * lum.astype(jnp.float32) + L_BLACK

        def encode(ref, start):
            lr = display(ref[0, 0, pl.ds(start, _CHUNK_ROWS), :])
            lg = display(ref[0, 1, pl.ds(start, _CHUNK_ROWS), :])
            lb = display(ref[0, 2, pl.ds(start, _CHUNK_ROWS), :])
            y = 0.2126 * lr + 0.7152 * lg + 0.0722 * lb   # >= L_BLACK > 0
            inv_y = pl.reciprocal(y, approx=True)         # 1 EUP op, 2 VPU muls
            rg = lr - lg                                  # red-green opponent
            yb = 0.5 * (lr + lg) - lb                     # yellow-blue opponent
            return jnp.log(y), rg * inv_y, yb * inv_y

        def beta_pow_err(a, b):
            # |d|^3.5 = d^3 * sqrt(d): one EUP sqrt, the rest co-issues on VPU.
            # Differences and powers stay in f32 (cancellation-sensitive).
            d = jnp.abs(a - b)
            return (d * d) * d * jnp.sqrt(d)

        def body(i, acc):
            start = pl.multiple_of(i * _CHUNK_ROWS, _CHUNK_ROWS)
            pa, pc1, pc2 = encode(pred_ref, start)
            ta, tc1, tc2 = encode(targ_ref, start)
            err = (beta_pow_err(pa, ta)                    # W_ACH == 1.0
                   + W_RG * beta_pow_err(pc1, tc1)
                   + W_YB * beta_pow_err(pc2, tc2))        # (32, 128) f32
            return acc + err

        acc = jax.lax.fori_loop(
            0, n_chunks, body,
            jnp.zeros((_CHUNK_ROWS, _LANE), jnp.float32))
        out_ref[...] = acc[None, None].astype(out_ref.dtype)

    return kernel


def _run_pallas(pred, targ, tile_rows, eotf_dtype):
    """pred/targ: (B, 3, total_rows, 128). Returns (B, n_tiles, 32, 128) sums."""
    B, C, total_rows, lane = pred.shape
    n_tiles = total_rows // tile_rows
    itemsize = jnp.dtype(pred.dtype).itemsize

    in_spec = pl.BlockSpec((1, C, tile_rows, lane), lambda b, t: (b, 0, t, 0))
    out_spec = pl.BlockSpec((1, 1, _CHUNK_ROWS, lane), lambda b, t: (b, t, 0, 0))

    in_block_bytes = C * tile_rows * lane * itemsize
    # 2 operands x 2 pipeline buffers + output/loop scratch headroom.
    vmem_limit = int(min(32 * 1024 * 1024, 4 * in_block_bytes + (8 << 20)))

    total_px = B * total_rows * lane
    cost = pl.CostEstimate(
        flops=60 * total_px,                # elementwise VPU work
        transcendentals=19 * total_px,      # 2x(6 exp/log + log + recip) + 3 sqrt
        bytes_accessed=2 * B * C * total_rows * lane * itemsize
        + B * n_tiles * _CHUNK_ROWS * lane * 4,
    )

    return pl.pallas_call(
        _make_kernel(eotf_dtype),
        out_shape=jax.ShapeDtypeStruct((B, n_tiles, _CHUNK_ROWS, lane),
                                       jnp.float32),
        grid_spec=pltpu.PrefetchScalarGridSpec(
            num_scalar_prefetch=0,
            grid=(B, n_tiles),
            in_specs=[in_spec, in_spec],
            out_specs=out_spec,
        ),
        compiler_params=pltpu.CompilerParams(
            dimension_semantics=("parallel", "parallel"),
            vmem_limit_bytes=vmem_limit),
        cost_estimate=cost,
    )(pred, targ)


def cvvdp_forward(predictions, targets, dim_order="BCHW"):
    """Mirrors CVVDP.forward: accepts CHW or BCHW/BHWC, returns scalar JOD."""
    if predictions.ndim == 3:
        predictions = predictions[None]
        targets = targets[None]
    if dim_order == "BHWC":
        # TODO(synk): BHWC needs a real transpose copy; a channel-last kernel
        #             variant would avoid it but is not implemented here.
        predictions = jnp.transpose(predictions, (0, 3, 1, 2))
        targets = jnp.transpose(targets, (0, 3, 1, 2))
    if not jnp.issubdtype(predictions.dtype, jnp.floating):
        predictions = predictions.astype(jnp.float32)
        targets = targets.astype(jnp.float32)

    B, C, H, W = predictions.shape
    if C != 3:
        raise ValueError("CVVDP expects 3-channel RGB frames")
    n_pix = H * W

    # ------------------------------------------------------------------
    # Tiling: pixels as dense (rows, 128) slabs, rows a multiple of 32 so the
    # in-kernel chunk loop and every dtype's native sublane tiling are packed.
    # ------------------------------------------------------------------
    itemsize = jnp.dtype(predictions.dtype).itemsize
    n_rows = pl.cdiv(n_pix, _LANE)
    n_rows_c = _round_up(n_rows, _CHUNK_ROWS)

    def derive_tiling(isz):
        max_rows = _MAX_TILE_ROWS_NARROW if isz <= 2 else _MAX_TILE_ROWS_F32
        tile_rows = min(max_rows, n_rows_c)
        n_tiles = pl.cdiv(n_rows_c, tile_rows)
        total_rows = n_tiles * tile_rows
        return tile_rows, total_rows, total_rows * _LANE - n_pix

    kernel_dtype = predictions.dtype
    tile_rows, total_rows, pad_pix = derive_tiling(itemsize)
    if pad_pix and itemsize > 2:
        # A materialising pad pass is unavoidable; fold a bf16 narrowing into
        # the same fused copy so the kernel-side DMA bytes are halved.
        kernel_dtype = jnp.bfloat16
        tile_rows, total_rows, pad_pix = derive_tiling(2)

    def prep(x):
        x = x.reshape(B, C, n_pix).astype(kernel_dtype)
        if pad_pix:
            # Both images get the same pad value, so padded pixels contribute
            # exactly zero error (d = 0 -> d^3*sqrt(d) = 0).
            x = jnp.pad(x, ((0, 0), (0, 0), (0, pad_pix)), constant_values=0.5)
        return x.reshape(B, C, total_rows, _LANE)

    sums = _run_pallas(prep(predictions), prep(targets), tile_rows,
                       _eotf_dtype())
    frame_sums = jnp.sum(sums, axis=(1, 2, 3))            # (B,)

    per_frame = (frame_sums / n_pix) ** (1.0 / BETA)      # Minkowski pooling finish
    D = jnp.mean(per_frame)                               # pool over frames (batch)
    jod = 10.0 - JOD_A * (D ** JOD_EXP)                   # JOD regression
    return jod


if __name__ == "__main__":
    key = jax.random.PRNGKey(0)
    k1, k2 = jax.random.split(key)
    B, C, H, W = 2, 3, 16, 16                # CVVDP operates on RGB frames
    predictions = jax.random.uniform(k1, (B, C, H, W), dtype=jnp.float32)
    targets = jax.random.uniform(k2, (B, C, H, W), dtype=jnp.float32)

    result = cvvdp_forward(predictions, targets, dim_order="BCHW")
    jax.block_until_ready(result)
    assert result.shape == ()
    assert bool(jnp.isfinite(result))
    print("KERNEL_OK")
</pallas_src>

<mosaic_0001>
module attributes {stable_mosaic.version = 11 : i64} {
  func.func @kernel(%arg0: i32, %arg1: i32, %arg2: memref<1x3x32x128xbf16, #tpu.memory_space<vmem>>, %arg3: memref<1x3x32x128xbf16, #tpu.memory_space<vmem>>, %arg4: memref<1x1x32x128xf32, #tpu.memory_space<vmem>>) attributes {dimension_semantics = [#tpu.dimension_semantics<parallel>, #tpu.dimension_semantics<parallel>], iteration_bounds = array<i64: 2, 1>, scalar_prefetch = 0 : i64, scratch_operands = 0 : i64, tpu.core_type = #tpu.core_type<tc>, window_params = [{transform_indices = @transform_0, window_bounds = array<i64: 1, 3, 32, 128>}, {transform_indices = @transform_1, window_bounds = array<i64: 1, 3, 32, 128>}, {transform_indices = @transform_2, window_bounds = array<i64: 1, 1, 32, 128>}]} {
    %cst = arith.constant 0.000000e+00 : f32
    %0 = vector.broadcast %cst : f32 to vector<32x128xf32>
    %c0_i32 = arith.constant 0 : i32
    %c32_i32 = arith.constant 32 : i32
    %1 = arith.muli %c0_i32, %c32_i32 : i32
    %2 = tpu.assume_multiple %1, 32 : i32
    %c0 = arith.constant 0 : index
    %c0_0 = arith.constant 0 : index
    %3 = arith.index_cast %2 : i32 to index
    %c0_1 = arith.constant 0 : index
    %4 = vector.load %arg2[%c0, %c0_0, %3, %c0_1] : memref<1x3x32x128xbf16, #tpu.memory_space<vmem>>, vector<1x1x32x128xbf16>
    %5 = vector.shape_cast %4 : vector<1x1x32x128xbf16> to vector<32x128xbf16>
    %cst_2 = arith.constant 0.000000e+00 : f32
    %cst_3 = arith.constant 1.000000e+00 : f32
    %6 = arith.truncf %cst_2 : f32 to bf16
    %7 = vector.broadcast %6 : bf16 to vector<32x128xbf16>
    %8 = arith.maximumf %7, %5 : vector<32x128xbf16>
    %9 = arith.truncf %cst_3 : f32 to bf16
    %10 = vector.broadcast %9 : bf16 to vector<32x128xbf16>
    %11 = arith.minimumf %10, %8 : vector<32x128xbf16>
    %cst_4 = arith.constant 1.001870e-12 : bf16
    %12 = vector.broadcast %cst_4 : bf16 to vector<32x128xbf16>
    %13 = arith.maximumf %11, %12 : vector<32x128xbf16>
    %14 = math.log %13 : vector<32x128xbf16>
    %cst_5 = arith.constant 2.203130e+00 : bf16
    %15 = vector.broadcast %cst_5 : bf16 to vector<32x128xbf16>
    %16 = arith.mulf %15, %14 : vector<32x128xbf16>
    %17 = math.exp %16 : vector<32x128xbf16>
    %18 = arith.extf %17 : vector<32x128xbf16> to vector<32x128xf32>
    %cst_6 = arith.constant 1.998000e+02 : f32
    %19 = vector.broadcast %cst_6 : f32 to vector<32x128xf32>
    %20 = arith.mulf %19, %18 : vector<32x128xf32>
    %cst_7 = arith.constant 2.000000e-01 : f32
    %21 = vector.broadcast %cst_7 : f32 to vector<32x128xf32>
    %22 = arith.addf %20, %21 : vector<32x128xf32>
    %c0_8 = arith.constant 0 : index
    %c1 = arith.constant 1 : index
    %23 = arith.index_cast %2 : i32 to index
    %c0_9 = arith.constant 0 : index
    %24 = vector.load %arg2[%c0_8, %c1, %23, %c0_9] : memref<1x3x32x128xbf16, #tpu.memory_space<vmem>>, vector<1x1x32x128xbf16>
    %25 = vector.shape_cast %24 : vector<1x1x32x128xbf16> to vector<32x128xbf16>
    %cst_10 = arith.constant 0.000000e+00 : f32
    %cst_11 = arith.constant 1.000000e+00 : f32
    %26 = arith.truncf %cst_10 : f32 to bf16
    %27 = vector.broadcast %26 : bf16 to vector<32x128xbf16>
    %28 = arith.maximumf %27, %25 : vector<32x128xbf16>
    %29 = arith.truncf %cst_11 : f32 to bf16
    %30 = vector.broadcast %29 : bf16 to vector<32x128xbf16>
    %31 = arith.minimumf %30, %28 : vector<32x128xbf16>
    %cst_12 = arith.constant 1.001870e-12 : bf16
    %32 = vector.broadcast %cst_12 : bf16 to vector<32x128xbf16>
    %33 = arith.maximumf %31, %32 : vector<32x128xbf16>
    %34 = math.log %33 : vector<32x128xbf16>
    %cst_13 = arith.constant 2.203130e+00 : bf16
    %35 = vector.broadcast %cst_13 : bf16 to vector<32x128xbf16>
    %36 = arith.mulf %35, %34 : vector<32x128xbf16>
    %37 = math.exp %36 : vector<32x128xbf16>
    %38 = arith.extf %37 : vector<32x128xbf16> to vector<32x128xf32>
    %cst_14 = arith.constant 1.998000e+02 : f32
    %39 = vector.broadcast %cst_14 : f32 to vector<32x128xf32>
    %40 = arith.mulf %39, %38 : vector<32x128xf32>
    %cst_15 = arith.constant 2.000000e-01 : f32
    %41 = vector.broadcast %cst_15 : f32 to vector<32x128xf32>
    %42 = arith.addf %40, %41 : vector<32x128xf32>
    %c0_16 = arith.constant 0 : index
    %c2 = arith.constant 2 : index
    %43 = arith.index_cast %2 : i32 to index
    %c0_17 = arith.constant 0 : index
    %44 = vector.load %arg2[%c0_16, %c2, %43, %c0_17] : memref<1x3x32x128xbf16, #tpu.memory_space<vmem>>, vector<1x1x32x128xbf16>
    %45 = vector.shape_cast %44 : vector<1x1x32x128xbf16> to vector<32x128xbf16>
    %cst_18 = arith.constant 0.000000e+00 : f32
    %cst_19 = arith.constant 1.000000e+00 : f32
    %46 = arith.truncf %cst_18 : f32 to bf16
    %47 = vector.broadcast %46 : bf16 to vector<32x128xbf16>
    %48 = arith.maximumf %47, %45 : vector<32x128xbf16>
    %49 = arith.truncf %cst_19 : f32 to bf16
    %50 = vector.broadcast %49 : bf16 to vector<32x128xbf16>
    %51 = arith.minimumf %50, %48 : vector<32x128xbf16>
    %cst_20 = arith.constant 1.001870e-12 : bf16
    %52 = vector.broadcast %cst_20 : bf16 to vector<32x128xbf16>
    %53 = arith.maximumf %51, %52 : vector<32x128xbf16>
    %54 = math.log %53 : vector<32x128xbf16>
    %cst_21 = arith.constant 2.203130e+00 : bf16
    %55 = vector.broadcast %cst_21 : bf16 to vector<32x128xbf16>
    %56 = arith.mulf %55, %54 : vector<32x128xbf16>
    %57 = math.exp %56 : vector<32x128xbf16>
    %58 = arith.extf %57 : vector<32x128xbf16> to vector<32x128xf32>
    %cst_22 = arith.constant 1.998000e+02 : f32
    %59 = vector.broadcast %cst_22 : f32 to vector<32x128xf32>
    %60 = arith.mulf %59, %58 : vector<32x128xf32>
    %cst_23 = arith.constant 2.000000e-01 : f32
    %61 = vector.broadcast %cst_23 : f32 to vector<32x128xf32>
    %62 = arith.addf %60, %61 : vector<32x128xf32>
    %cst_24 = arith.constant 2.126000e-01 : f32
    %63 = vector.broadcast %cst_24 : f32 to vector<32x128xf32>
    %64 = arith.mulf %63, %22 : vector<32x128xf32>
    %cst_25 = arith.constant 7.152000e-01 : f32
    %65 = vector.broadcast %cst_25 : f32 to vector<32x128xf32>
    %66 = arith.mulf %65, %42 : vector<32x128xf32>
    %67 = arith.addf %64, %66 : vector<32x128xf32>
    %cst_26 = arith.constant 7.220000e-02 : f32
    %68 = vector.broadcast %cst_26 : f32 to vector<32x128xf32>
    %69 = arith.mulf %68, %62 : vector<32x128xf32>
    %70 = arith.addf %67, %69 : vector<32x128xf32>
    %71 = tpu.reciprocal %70 {approx = true} : vector<32x128xf32> -> vector<32x128xf32>
    %72 = arith.subf %22, %42 : vector<32x128xf32>
    %73 = arith.addf %22, %42 : vector<32x128xf32>
    %cst_27 = arith.constant 5.000000e-01 : f32
    %74 = vector.broadcast %cst_27 : f32 to vector<32x128xf32>
    %75 = arith.mulf %74, %73 : vector<32x128xf32>
    %76 = arith.subf %75, %62 : vector<32x128xf32>
    %77 = math.log %70 : vector<32x128xf32>
    %78 = arith.mulf %72, %71 : vector<32x128xf32>
    %79 = arith.mulf %76, %71 : vector<32x128xf32>
    %c0_28 = arith.constant 0 : index
    %c0_29 = arith.constant 0 : index
    %80 = arith.index_cast %2 : i32 to index
    %c0_30 = arith.constant 0 : index
    %81 = vector.load %arg3[%c0_28, %c0_29, %80, %c0_30] : memref<1x3x32x128xbf16, #tpu.memory_space<vmem>>, vector<1x1x32x128xbf16>
    %82 = vector.shape_cast %81 : vector<1x1x32x128xbf16> to vector<32x128xbf16>
    %cst_31 = arith.constant 0.000000e+00 : f32
    %cst_32 = arith.constant 1.000000e+00 : f32
    %83 = arith.truncf %cst_31 : f32 to bf16
    %84 = vector.broadcast %83 : bf16 to vector<32x128xbf16>
    %85 = arith.maximumf %84, %82 : vector<32x128xbf16>
    %86 = arith.truncf %cst_32 : f32 to bf16
    %87 = vector.broadcast %86 : bf16 to vector<32x128xbf16>
    %88 = arith.minimumf %87, %85 : vector<32x128xbf16>
    %cst_33 = arith.constant 1.001870e-12 : bf16
    %89 = vector.broadcast %cst_33 : bf16 to vector<32x128xbf16>
    %90 = arith.maximumf %88, %89 : vector<32x128xbf16>
    %91 = math.log %90 : vector<32x128xbf16>
    %cst_34 = arith.constant 2.203130e+00 : bf16
    %92 = vector.broadcast %cst_34 : bf16 to vector<32x128xbf16>
    %93 = arith.mulf %92, %91 : vector<32x128xbf16>
    %94 = math.exp %93 : vector<32x128xbf16>
    %95 = arith.extf %94 : vector<32x128xbf16> to vector<32x128xf32>
    %cst_35 = arith.constant 1.998000e+02 : f32
    %96 = vector.broadcast %cst_35 : f32 to vector<32x128xf32>
    %97 = arith.mulf %96, %95 : vector<32x128xf32>
    %cst_36 = arith.constant 2.000000e-01 : f32
    %98 = vector.broadcast %cst_36 : f32 to vector<32x128xf32>
    %99 = arith.addf %97, %98 : vector<32x128xf32>
    %c0_37 = arith.constant 0 : index
    %c1_38 = arith.constant 1 : index
    %100 = arith.index_cast %2 : i32 to index
    %c0_39 = arith.constant 0 : index
    %101 = vector.load %arg3[%c0_37, %c1_38, %100, %c0_39] : memref<1x3x32x128xbf16, #tpu.memory_space<vmem>>, vector<1x1x32x128xbf16>
    %102 = vector.shape_cast %101 : vector<1x1x32x128xbf16> to vector<32x128xbf16>
    %cst_40 = arith.constant 0.000000e+00 : f32
    %cst_41 = arith.constant 1.000000e+00 : f32
    %103 = arith.truncf %cst_40 : f32 to bf16
    %104 = vector.broadcast %103 : bf16 to vector<32x128xbf16>
    %105 = arith.maximumf %104, %102 : vector<32x128xbf16>
    %106 = arith.truncf %cst_41 : f32 to bf16
    %107 = vector.broadcast %106 : bf16 to vector<32x128xbf16>
    %108 = arith.minimumf %107, %105 : vector<32x128xbf16>
    %cst_42 = arith.constant 1.001870e-12 : bf16
    %109 = vector.broadcast %cst_42 : bf16 to vector<32x128xbf16>
    %110 = arith.maximumf %108, %109 : vector<32x128xbf16>
    %111 = math.log %110 : vector<32x128xbf16>
    %cst_43 = arith.constant 2.203130e+00 : bf16
    %112 = vector.broadcast %cst_43 : bf16 to vector<32x128xbf16>
    %113 = arith.mulf %112, %111 : vector<32x128xbf16>
    %114 = math.exp %113 : vector<32x128xbf16>
    %115 = arith.extf %114 : vector<32x128xbf16> to vector<32x128xf32>
    %cst_44 = arith.constant 1.998000e+02 : f32
    %116 = vector.broadcast %cst_44 : f32 to vector<32x128xf32>
    %117 = arith.mulf %116, %115 : vector<32x128xf32>
    %cst_45 = arith.constant 2.000000e-01 : f32
    %118 = vector.broadcast %cst_45 : f32 to vector<32x128xf32>
    %119 = arith.addf %117, %118 : vector<32x128xf32>
    %c0_46 = arith.constant 0 : index
    %c2_47 = arith.constant 2 : index
    %120 = arith.index_cast %2 : i32 to index
    %c0_48 = arith.constant 0 : index
    %121 = vector.load %arg3[%c0_46, %c2_47, %120, %c0_48] : memref<1x3x32x128xbf16, #tpu.memory_space<vmem>>, vector<1x1x32x128xbf16>
    %122 = vector.shape_cast %121 : vector<1x1x32x128xbf16> to vector<32x128xbf16>
    %cst_49 = arith.constant 0.000000e+00 : f32
    %cst_50 = arith.constant 1.000000e+00 : f32
    %123 = arith.truncf %cst_49 : f32 to bf16
    %124 = vector.broadcast %123 : bf16 to vector<32x128xbf16>
    %125 = arith.maximumf %124, %122 : vector<32x128xbf16>
    %126 = arith.truncf %cst_50 : f32 to bf16
    %127 = vector.broadcast %126 : bf16 to vector<32x128xbf16>
    %128 = arith.minimumf %127, %125 : vector<32x128xbf16>
    %cst_51 = arith.constant 1.001870e-12 : bf16
    %129 = vector.broadcast %cst_51 : bf16 to vector<32x128xbf16>
    %130 = arith.maximumf %128, %129 : vector<32x128xbf16>
    %131 = math.log %130 : vector<32x128xbf16>
    %cst_52 = arith.constant 2.203130e+00 : bf16
    %132 = vector.broadcast %cst_52 : bf16 to vector<32x128xbf16>
    %133 = arith.mulf %132, %131 : vector<32x128xbf16>
    %134 = math.exp %133 : vector<32x128xbf16>
    %135 = arith.extf %134 : vector<32x128xbf16> to vector<32x128xf32>
    %cst_53 = arith.constant 1.998000e+02 : f32
    %136 = vector.broadcast %cst_53 : f32 to vector<32x128xf32>
    %137 = arith.mulf %136, %135 : vector<32x128xf32>
    %cst_54 = arith.constant 2.000000e-01 : f32
    %138 = vector.broadcast %cst_54 : f32 to vector<32x128xf32>
    %139 = arith.addf %137, %138 : vector<32x128xf32>
    %cst_55 = arith.constant 2.126000e-01 : f32
    %140 = vector.broadcast %cst_55 : f32 to vector<32x128xf32>
    %141 = arith.mulf %140, %99 : vector<32x128xf32>
    %cst_56 = arith.constant 7.152000e-01 : f32
    %142 = vector.broadcast %cst_56 : f32 to vector<32x128xf32>
    %143 = arith.mulf %142, %119 : vector<32x128xf32>
    %144 = arith.addf %141, %143 : vector<32x128xf32>
    %cst_57 = arith.constant 7.220000e-02 : f32
    %145 = vector.broadcast %cst_57 : f32 to vector<32x128xf32>
    %146 = arith.mulf %145, %139 : vector<32x128xf32>
    %147 = arith.addf %144, %146 : vector<32x128xf32>
    %148 = tpu.reciprocal %147 {approx = true} : vector<32x128xf32> -> vector<32x128xf32>
    %149 = arith.subf %99, %119 : vector<32x128xf32>
    %150 = arith.addf %99, %119 : vector<32x128xf32>
    %cst_58 = arith.constant 5.000000e-01 : f32
    %151 = vector.broadcast %cst_58 : f32 to vector<32x128xf32>
    %152 = arith.mulf %151, %150 : vector<32x128xf32>
    %153 = arith.subf %152, %139 : vector<32x128xf32>
    %154 = math.log %147 : vector<32x128xf32>
    %155 = arith.mulf %149, %148 : vector<32x128xf32>
    %156 = arith.mulf %153, %148 : vector<32x128xf32>
    %157 = arith.subf %77, %154 : vector<32x128xf32>
    %158 = math.absf %157 : vector<32x128xf32>
    %159 = arith.mulf %158, %158 : vector<32x128xf32>
    %160 = arith.mulf %159, %158 : vector<32x128xf32>
    %161 = math.sqrt %158 : vector<32x128xf32>
    %162 = arith.mulf %160, %161 : vector<32x128xf32>
    %163 = arith.subf %78, %155 : vector<32x128xf32>
    %164 = math.absf %163 : vector<32x128xf32>
    %165 = arith.mulf %164, %164 : vector<32x128xf32>
    %166 = arith.mulf %165, %164 : vector<32x128xf32>
    %167 = math.sqrt %164 : vector<32x128xf32>
    %168 = arith.mulf %166, %167 : vector<32x128xf32>
    %cst_59 = arith.constant 3.500000e-01 : f32
    %169 = vector.broadcast %cst_59 : f32 to vector<32x128xf32>
    %170 = arith.mulf %169, %168 : vector<32x128xf32>
    %171 = arith.addf %162, %170 : vector<32x128xf32>
    %172 = arith.subf %79, %156 : vector<32x128xf32>
    %173 = math.absf %172 : vector<32x128xf32>
    %174 = arith.mulf %173, %173 : vector<32x128xf32>
    %175 = arith.mulf %174, %173 : vector<32x128xf32>
    %176 = math.sqrt %173 : vector<32x128xf32>
    %177 = arith.mulf %175, %176 : vector<32x128xf32>
    %cst_60 = arith.constant 3.500000e-01 : f32
    %178 = vector.broadcast %cst_60 : f32 to vector<32x128xf32>
    %179 = arith.mulf %178, %177 : vector<32x128xf32>
    %180 = arith.addf %171, %179 : vector<32x128xf32>
    %181 = arith.addf %0, %180 : vector<32x128xf32>
    %c1_i32 = arith.constant 1 : i32
    %182 = vector.shape_cast %181 : vector<32x128xf32> to vector<1x1x32x128xf32>
    %c0_61 = arith.constant 0 : index
    %c0_62 = arith.constant 0 : index
    %c0_63 = arith.constant 0 : index
    %c0_64 = arith.constant 0 : index
    %183 = vector.load %arg4[%c0_61, %c0_62, %c0_63, %c0_64] : memref<1x1x32x128xf32, #tpu.memory_space<vmem>>, vector<1x1x32x128xf32>
    tpu.vector_store %arg4[%c0_61, %c0_62, %c0_63, %c0_64], %182 {strides = array<i32>} : memref<1x1x32x128xf32, #tpu.memory_space<vmem>>, vector<1x1x32x128xf32>,
    return
  }
  func.func @transform_0(%arg0: i32, %arg1: i32) -> (i32, i32, i32, i32) {
    %c0_i32 = arith.constant 0 : i32
    %c0_i32_0 = arith.constant 0 : i32
    %c0_i32_1 = arith.constant 0 : i32
    return %arg0, %c0_i32, %arg1, %c0_i32_0 : i32, i32, i32, i32
  }
  func.func @transform_1(%arg0: i32, %arg1: i32) -> (i32, i32, i32, i32) {
    %c0_i32 = arith.constant 0 : i32
    %c0_i32_0 = arith.constant 0 : i32
    %c0_i32_1 = arith.constant 0 : i32
    return %arg0, %c0_i32, %arg1, %c0_i32_0 : i32, i32, i32, i32
  }
  func.func @transform_2(%arg0: i32, %arg1: i32) -> (i32, i32, i32, i32) {
    %c0_i32 = arith.constant 0 : i32
    %c0_i32_0 = arith.constant 0 : i32
    %c0_i32_1 = arith.constant 0 : i32
    return %arg0, %arg1, %c0_i32, %c0_i32_0 : i32, i32, i32, i32
  }
}

</mosaic_0001>

<llo_original>
// kernel: tpu_custom_call.1
$region0: #{tpu_custom_call.1}
  #allocation0 [shape = 'u32[]', space=smem, size = 0x4, offset = 0x4, fixed_abs, tag = 'smem constant byte address 0x4 - core index']
  #allocation1 [shape = 'u32[144,128]{1,0:T(1,128)}', space=vmem, size = 0x12000, scoped, tag = 'internal scratch']
  %s0 = inlined_call_operand.hbm [shape: bf16[2,3,32,128], index: 0, kind: input, shape index: {}]
  %s1 = inlined_call_operand.hbm [shape: bf16[2,3,32,128], index: 1, kind: input, shape index: {}]
  %s2 = inlined_call_operand.hbm [shape: f32[2,1,32,128], index: 2, kind: output, shape index: {}]
  %s3 = sld [smem:[#allocation0]]
  $region49: #{tpu_custom_call.1} parent=0
    _
  %s5 = ssub.s32 1, %s3
  %s6 = scalar_select 0, %s5, %s3
  $region1: #{tpu_custom_call.1} parent=0
    #allocation2 [shape = 'u8[49152]{0}', space=vmem, size = 0xc000, scoped, tag = 'input window, operand 0']
    #allocation3 [shape = 's32[2]{0}', space=sflag, size = 0x8, scoped, tag = 'scoped memory for tpu_custom_call.1']
    #allocation4 [shape = 's32[2]{0}', space=sflag, size = 0x8, scoped, tag = 'scoped memory for tpu_custom_call.1']
    #allocation5 [shape = 'u8[49152]{0}', space=vmem, size = 0xc000, scoped, tag = 'input window, operand 1']
    #allocation6 [shape = 's32[2]{0}', space=sflag, size = 0x8, scoped, tag = 'scoped memory for tpu_custom_call.1']
    #allocation7 [shape = 'u8[32768]{0}', space=vmem, size = 0x8000, scoped, tag = 'output window, operand 0']
    %7 = vsyncpa [#allocation3], 0
    %s8 = scalar_lea.sflag [#allocation3], 1
    %9 = vsyncpa %s8, 0
    %10 = vsyncpa [#allocation6], 0
    %s11 = scalar_lea.sflag [#allocation6], 1
    %12 = vsyncpa %s11, 0
    %13 = vsyncpa [#allocation4], 0
    %s14 = scalar_lea.sflag [#allocation4], 1
    %15 = vsyncpa %s14, 0
    loop: start=0, step=1, limit=4
    $region2: #{tpu_custom_call.1} parent=1 // loop_pre_header
      _
    $region3: #{tpu_custom_call.1} parent=1 // loop_header
      %s17 = sphi 0, %s21
      %p18 = scmp.ge.s32.totalorder %s17, 4
      %s24 = sphi 0, %s36
      %s25 = sphi 0, %s32
      %s26 = sphi 0, %s24
      %s27 = sphi 0, %s25
      %s28 = sphi 0, %s26
      %s29 = sphi 0, %s27
      %s41 = sphi 0, %s43
      %s44 = sphi 0, %s41
      %s45 = sphi 0, %s44
      %s61 = sphi 0, %s45
      %s69 = sphi 0, %s71
      %s72 = sphi 0, %s69
      %s73 = sphi 0, %s72
      %s89 = sphi 0, %s73
      %s97 = sphi 0, %s99
      %s100 = sphi 0, %s97
      %s101 = sphi 0, %s100
      %s117 = sphi 0, %s101
    $region4: #{tpu_custom_call.1} parent=1 // loop_header_branch
      %20 = sbr.rel (%p18) target = $region8
    $region5: #{tpu_custom_call.1} parent=1 // loop_body
      %s22 = ssub.s32 %s17, 1
      %s23 = ssub.s32 %s17, 2
      %s30 = sadd.s32 1, %s25
      %p31 = scmp.ge.s32.totalorder %s30, 1
      %s32 = scalar_select %p31, 0, %s30
      %s33 = sadd.s32 1, %s24
      %s34 = scalar_select %p31, %s33, %s24
      %p35 = scmp.ge.s32.totalorder %s34, 2
      %s36 = scalar_select %p35, 0, %s34
      %s37 = ssub.s32 %s24, %s36
      %s38 = ssub.s32 %s25, %s32
      %s39 = sor.u32 %s37, %s38
      %p40 = scmp.eq.s32.totalorder %s39, 0
      %s42 = sadd.s32 %s41, 1
      %s43 = scalar_select %p40, %s41, %s42
      %p46 = pneg %p40
      %p47 = scmp.eq.s32.totalorder %s17, 1
      %p48 = por %p46, %p47
      %p49 = scmp.ne.s32.totalorder %s41, %s44
      %p50 = scmp.eq.s32.totalorder %s17, 0
      %p51 = por %p49, %p50
      %p52 = scmp.ne.s32.totalorder %s41, %s44
      %p53 = scmp.eq.s32.totalorder %s22, 1
      %p54 = por %p52, %p53
      %p55 = scmp.ne.s32.totalorder %s44, %s45
      %p56 = scmp.eq.s32.totalorder %s22, 0
      %p57 = por %p55, %p56
      %p58 = scmp.ne.s32.totalorder %s44, %s45
      %p59 = scmp.eq.s32.totalorder %s23, 1
      %p60 = por %p58, %p59
      %p62 = scmp.ne.s32.totalorder %s45, %s61
      %p63 = scmp.eq.s32.totalorder %s23, 0
      %p64 = por %p62, %p63
      %s65 = ssub.s32 %s24, %s36
      %s66 = ssub.s32 %s25, %s32
      %s67 = sor.u32 %s65, %s66
      %p68 = scmp.eq.s32.totalorder %s67, 0
      %s70 = sadd.s32 %s69, 1
      %s71 = scalar_select %p68, %s69, %s70
      %p74 = pneg %p68
      %p75 = scmp.eq.s32.totalorder %s17, 1
      %p76 = por %p74, %p75
      %p77 = scmp.ne.s32.totalorder %s69, %s72
      %p78 = scmp.eq.s32.totalorder %s17, 0
      %p79 = por %p77, %p78
      %p80 = scmp.ne.s32.totalorder %s69, %s72
      %p81 = scmp.eq.s32.totalorder %s22, 1
      %p82 = por %p80, %p81
      %p83 = scmp.ne.s32.totalorder %s72, %s73
      %p84 = scmp.eq.s32.totalorder %s22, 0
      %p85 = por %p83, %p84
      %p86 = scmp.ne.s32.totalorder %s72, %s73
      %p87 = scmp.eq.s32.totalorder %s23, 1
      %p88 = por %p86, %p87
      %p90 = scmp.ne.s32.totalorder %s73, %s89
      %p91 = scmp.eq.s32.totalorder %s23, 0
      %p92 = por %p90, %p91
      %s93 = ssub.s32 %s24, %s36
      %s94 = ssub.s32 %s25, %s32
      %s95 = sor.u32 %s93, %s94
      %p96 = scmp.eq.s32.totalorder %s95, 0
      %s98 = sadd.s32 %s97, 1
      %s99 = scalar_select %p96, %s97, %s98
      %p102 = pneg %p96
      %p103 = scmp.eq.s32.totalorder %s17, 1
      %p104 = por %p102, %p103
      %p105 = scmp.ne.s32.totalorder %s97, %s100
      %p106 = scmp.eq.s32.totalorder %s17, 0
      %p107 = por %p105, %p106
      %p108 = scmp.ne.s32.totalorder %s97, %s100
      %p109 = scmp.eq.s32.totalorder %s22, 1
      %p110 = por %p108, %p109
      %p111 = scmp.ne.s32.totalorder %s100, %s101
      %p112 = scmp.eq.s32.totalorder %s22, 0
      %p113 = por %p111, %p112
      %p114 = scmp.ne.s32.totalorder %s100, %s101
      %p115 = scmp.eq.s32.totalorder %s23, 1
      %p116 = por %p114, %p115
      %p118 = scmp.ne.s32.totalorder %s101, %s117
      %p119 = scmp.eq.s32.totalorder %s23, 0
      %p120 = por %p118, %p119
      %p121 = scmp.le.s32.totalorder 1, %s17
      %p122 = scmp.lt.s32.totalorder %s17, 3
      %p123 = pnand %p121, %p122
      %p124 = pneg %p123
      // Predicated region
      $region9: #{tpu_custom_call.1} parent=5 // pred_check
        _
      $region10: #{tpu_custom_call.1} parent=5 // pred_check_branch
        %126 = sbr.rel (%p123) target = $region12
      $region11: #{tpu_custom_call.1} parent=5 // pred_region
        %s127 = ssub.s32 %s17, 1
      $region12: #{tpu_custom_call.1} parent=5 // pred_fallthru
        _
      %p128 = scmp.lt.s32.totalorder %s17, 2
      // Predicated region
      $region13: #{tpu_custom_call.1} parent=5 // pred_check
        %p129 = pneg %p128
      $region14: #{tpu_custom_call.1} parent=5 // pred_check_branch
        %131 = sbr.rel (%p129) target = $region16
      $region15: #{tpu_custom_call.1} parent=5 // pred_region
        // Predicated region
        $region17: #{tpu_custom_call.1} parent=15 // pred_check
          %p132 = pneg %p51
        $region18: #{tpu_custom_call.1} parent=15 // pred_check_branch
          %134 = sbr.rel (%p132) target = $region20
        $region19: #{tpu_custom_call.1} parent=15 // pred_region
          %s135 = sand.u32 %s41, 1
          %s136 = scalar_lea.sflag [#allocation3], %s135
          %s137 = sand.u32 %s41, 1
          %s138 = smul.addr %s137, 48
          %s139 = scalar_lea.vmem [#allocation2], %s138
          %s140 = smul.u32 4, %s25
          %s142 = ssub.s32 768, 768
          %143 = vsyncadd %s136, %s142
          %s144 = smul.addr %s24, 12
          %s145 = sadd.s32 %s140, %s144
          %s146 = smul.addr %s145, 64
          %s147 = scalar_lea.hbm %s0, %s146
          %s148 = sshll.u32 %s139, 4
          %s149 = int_to_ptr.vmem [resolvable:$true] %s148
          %154 = dma.hbm_to_vmem [thread:$0]  %s147, 768, %s149, %s136, 64, 64, 4
        $region20: #{tpu_custom_call.1} parent=15 // pred_fallthru
          _
        // Predicated region
        $region21: #{tpu_custom_call.1} parent=15 // pred_check
          %p155 = pneg %p79
        $region22: #{tpu_custom_call.1} parent=15 // pred_check_branch
          %157 = sbr.rel (%p155) target = $region24
        $region23: #{tpu_custom_call.1} parent=15 // pred_region
          %s158 = sand.u32 %s69, 1
          %s159 = scalar_lea.sflag [#allocation6], %s158
          %s160 = sand.u32 %s69, 1
          %s161 = smul.addr %s160, 48
          %s162 = scalar_lea.vmem [#allocation5], %s161
          %s163 = smul.u32 4, %s25
          %s165 = ssub.s32 768, 768
          %166 = vsyncadd %s159, %s165
          %s167 = smul.addr %s24, 12
          %s168 = sadd.s32 %s163, %s167
          %s169 = smul.addr %s168, 64
          %s170 = scalar_lea.hbm %s1, %s169
          %s171 = sshll.u32 %s162, 4
          %s172 = int_to_ptr.vmem [resolvable:$true] %s171
          %177 = dma.hbm_to_vmem [thread:$0]  %s170, 768, %s172, %s159, 64, 64, 4
        $region24: #{tpu_custom_call.1} parent=15 // pred_fallthru
          _
      $region16: #{tpu_custom_call.1} parent=5 // pred_fallthru
        _
      %p178 = scmp.le.s32.totalorder 1, %s17
      %p179 = scmp.lt.s32.totalorder %s17, 3
      %p180 = pnand %p178, %p179
      %p181 = pneg %p180
      // Predicated region
      $region25: #{tpu_custom_call.1} parent=5 // pred_check
        _
      $region26: #{tpu_custom_call.1} parent=5 // pred_check_branch
        %183 = sbr.rel (%p180) target = $region28
      $region27: #{tpu_custom_call.1} parent=5 // pred_region
        %s184 = ssub.s32 %s17, 1
        %s185 = sand.u32 %s44, 1
        %s186 = scalar_lea.sflag [#allocation3], %s185
        %s187 = sand.u32 %s44, 1
        %s188 = smul.addr %s187, 48
        %s189 = scalar_lea.vmem [#allocation2], %s188
        // Predicated region
        $region29: #{tpu_custom_call.1} parent=27 // pred_check
          %p190 = pneg %p57
        $region30: #{tpu_custom_call.1} parent=27 // pred_check_branch
          %192 = sbr.rel (%p190) target = $region32
        $region31: #{tpu_custom_call.1} parent=27 // pred_region
          %193 = dma.done %s186, 768
        $region32: #{tpu_custom_call.1} parent=27 // pred_fallthru
          _
        %s194 = sand.u32 %s72, 1
        %s195 = scalar_lea.sflag [#allocation6], %s194
        %s196 = sand.u32 %s72, 1
        %s197 = smul.addr %s196, 48
        %s198 = scalar_lea.vmem [#allocation5], %s197
        // Predicated region
        $region33: #{tpu_custom_call.1} parent=27 // pred_check
          %p199 = pneg %p85
        $region34: #{tpu_custom_call.1} parent=27 // pred_check_branch
          %201 = sbr.rel (%p199) target = $region36
        $region35: #{tpu_custom_call.1} parent=27 // pred_region
          %202 = dma.done %s195, 768
        $region36: #{tpu_custom_call.1} parent=27 // pred_fallthru
          _
        %s203 = sand.u32 %s44, 1
        %s204 = scalar_lea.sflag [#allocation3], %s203
        %s205 = sand.u32 %s44, 1
        %s206 = smul.addr %s205, 48
        %s207 = scalar_lea.vmem [#allocation2], %s206
        %p208 = pneg %p57
        %p209 = pneg %p54
        %s210 = sand.u32 %s72, 1
        %s211 = scalar_lea.sflag [#allocation6], %s210
        %s212 = sand.u32 %s72, 1
        %s213 = smul.addr %s212, 48
        %s214 = scalar_lea.vmem [#allocation5], %s213
        %p215 = pneg %p85
        %p216 = pneg %p82
        %p217 = pneg %p113
        %p218 = pneg %p110
        %s219 = sand.u32 %s100, 1
        %s220 = scalar_lea.sflag [#allocation4], %s219
        %s221 = sand.u32 %s100, 1
        %s222 = smul.addr %s221, 32
        %s223 = scalar_lea.vmem [#allocation7], %s222
        %s224 = smul.u32 4, %s27
        %s225 = smul.u32 4, %s27
        %v230 = vld [vmem:[%s189] sm:$0xf]
        %v231 = vld [vmem:[%s189 + $0x4] sm:$0xf]
        %v232 = vld [vmem:[%s189 + $0x8] sm:$0xf]
        %v233 = vld [vmem:[%s189 + $0xc] sm:$0xf]
        %v234 = vmax.bf16 %v230, 0
        %v235 = vmax.bf16 %v231, 0
        %v236 = vmax.bf16 %v232, 0
        %v237 = vmax.bf16 %v233, 0
        %v238 = vmin.bf16 %v234, 1065369472
        %v239 = vmin.bf16 %v235, 1065369472
        %v240 = vmin.bf16 %v236, 1065369472
        %v241 = vmin.bf16 %v237, 1065369472
        %v242 = vmax.bf16 %v238, 730672013
        %v243 = vmax.bf16 %v239, 730672013
        %v244 = vmax.bf16 %v240, 730672013
        %v245 = vmax.bf16 %v241, 730672013
        %v246 = vlog2.bf16.pop %v242
        %v248 = vmul.bf16 %v246, 1060192049
        %v249 = vlog2.bf16.pop %v243
        %v251 = vmul.bf16 %v249, 1060192049
        %v252 = vlog2.bf16.pop %v244
        %v254 = vmul.bf16 %v252, 1060192049
        %v255 = vlog2.bf16.pop %v245
        %v257 = vmul.bf16 %v255, 1060192049
        %v258 = vmul.bf16 %v248, 1074610189
        %v259 = vmul.bf16 %v251, 1074610189
        %v260 = vmul.bf16 %v254, 1074610189
        %v261 = vmul.bf16 %v257, 1074610189
        %v263 = vmul.bf16 %v258, 1069105081
        %v264 = vpow.bf16.pop %v263
        %v266 = vmul.bf16 %v259, 1069105081
        %v267 = vpow.bf16.pop %v266
        %v269 = vmul.bf16 %v260, 1069105081
        %v270 = vpow.bf16.pop %v269
        %v272 = vmul.bf16 %v261, 1069105081
        %v273 = vpow.bf16.pop %v272
        %v274 = vunpack.c.l.bf16 %v264
        %v275 = vunpack.c.l.bf16 %v267
        %v276 = vunpack.c.l.bf16 %v270
        %v277 = vunpack.c.l.bf16 %v273
        %v278 = vmul.f32 %v274, 199.8
        %v279 = vmul.f32 %v275, 199.8
        %v280 = vmul.f32 %v276, 199.8
        %v281 = vmul.f32 %v277, 199.8
        %v282 = vadd.f32 %v278, 0.2
        %v283 = vadd.f32 %v279, 0.2
        %v284 = vadd.f32 %v280, 0.2
        %v285 = vadd.f32 %v281, 0.2
        %s286 = sadd.s32 0, 4
        %s287 = smul.addr %s286, 4
        %s288 = scalar_lea.vmem %s189, %s287 [#allocation2]
        %v289 = vld [vmem:[%s288] sm:$0xf]
        %v290 = vld [vmem:[%s288 + $0x4] sm:$0xf]
        %v291 = vld [vmem:[%s288 + $0x8] sm:$0xf]
        %v292 = vld [vmem:[%s288 + $0xc] sm:$0xf]
        %v293 = vmax.bf16 %v289, 0
        %v294 = vmax.bf16 %v290, 0
        %v295 = vmax.bf16 %v291, 0
        %v296 = vmax.bf16 %v292, 0
        %v297 = vmin.bf16 %v293, 1065369472
        %v298 = vmin.bf16 %v294, 1065369472
        %v299 = vmin.bf16 %v295, 1065369472
        %v300 = vmin.bf16 %v296, 1065369472
        %v301 = vmax.bf16 %v297, 730672013
        %v302 = vmax.bf16 %v298, 730672013
        %v303 = vmax.bf16 %v299, 730672013
        %v304 = vmax.bf16 %v300, 730672013
        %v305 = vlog2.bf16.pop %v301
        %v307 = vmul.bf16 %v305, 1060192049
        %v308 = vlog2.bf16.pop %v302
        %v310 = vmul.bf16 %v308, 1060192049
        %v311 = vlog2.bf16.pop %v303
        %v313 = vmul.bf16 %v311, 1060192049
        %v314 = vlog2.bf16.pop %v304
        %v316 = vmul.bf16 %v314, 1060192049
        %v317 = vmul.bf16 %v307, 1074610189
        %v318 = vmul.bf16 %v310, 1074610189
        %v319 = vmul.bf16 %v313, 1074610189
        %v320 = vmul.bf16 %v316, 1074610189
        %v322 = vmul.bf16 %v317, 1069105081
        %v323 = vpow.bf16.pop %v322
        %v325 = vmul.bf16 %v318, 1069105081
        %v326 = vpow.bf16.pop %v325
        %v328 = vmul.bf16 %v319, 1069105081
        %v329 = vpow.bf16.pop %v328
        %v331 = vmul.bf16 %v320, 1069105081
        %v332 = vpow.bf16.pop %v331
        %v333 = vunpack.c.l.bf16 %v323
        %v334 = vunpack.c.l.bf16 %v326
        %v335 = vunpack.c.l.bf16 %v329
        %v336 = vunpack.c.l.bf16 %v332
        %v337 = vmul.f32 %v333, 199.8
        %v338 = vmul.f32 %v334, 199.8
        %v339 = vmul.f32 %v335, 199.8
        %v340 = vmul.f32 %v336, 199.8
        %v341 = vadd.f32 %v337, 0.2
        %v342 = vadd.f32 %v338, 0.2
        %v343 = vadd.f32 %v339, 0.2
        %v344 = vadd.f32 %v340, 0.2
        %s345 = sadd.s32 0, 8
        %s346 = smul.addr %s345, 4
        %s347 = scalar_lea.vmem %s189, %s346 [#allocation2]
        %v348 = vld [vmem:[%s347] sm:$0xf]
        %v349 = vld [vmem:[%s347 + $0x4] sm:$0xf]
        %v350 = vld [vmem:[%s347 + $0x8] sm:$0xf]
        %v351 = vld [vmem:[%s347 + $0xc] sm:$0xf]
        %v352 = vmax.bf16 %v348, 0
        %v353 = vmax.bf16 %v349, 0
        %v354 = vmax.bf16 %v350, 0
        %v355 = vmax.bf16 %v351, 0
        %v356 = vmin.bf16 %v352, 1065369472
        %v357 = vmin.bf16 %v353, 1065369472
        %v358 = vmin.bf16 %v354, 1065369472
        %v359 = vmin.bf16 %v355, 1065369472
        %v360 = vmax.bf16 %v356, 730672013
        %v361 = vmax.bf16 %v357, 730672013
        %v362 = vmax.bf16 %v358, 730672013
        %v363 = vmax.bf16 %v359, 730672013
        %v364 = vlog2.bf16.pop %v360
        %v366 = vmul.bf16 %v364, 1060192049
        %v367 = vlog2.bf16.pop %v361
        %v369 = vmul.bf16 %v367, 1060192049
        %v370 = vlog2.bf16.pop %v362
        %v372 = vmul.bf16 %v370, 1060192049
        %v373 = vlog2.bf16.pop %v363
        %v375 = vmul.bf16 %v373, 1060192049
        %v376 = vmul.bf16 %v366, 1074610189
        %v377 = vmul.bf16 %v369, 1074610189
        %v378 = vmul.bf16 %v372, 1074610189
        %v379 = vmul.bf16 %v375, 1074610189
        %v381 = vmul.bf16 %v376, 1069105081
        %v382 = vpow.bf16.pop %v381
        %v384 = vmul.bf16 %v377, 1069105081
        %v385 = vpow.bf16.pop %v384
        %v387 = vmul.bf16 %v378, 1069105081
        %v388 = vpow.bf16.pop %v387
        %v390 = vmul.bf16 %v379, 1069105081
        %v391 = vpow.bf16.pop %v390
        %v392 = vunpack.c.l.bf16 %v382
        %v393 = vunpack.c.l.bf16 %v385
        %v394 = vunpack.c.l.bf16 %v388
        %v395 = vunpack.c.l.bf16 %v391
        %v396 = vmul.f32 %v392, 199.8
        %v397 = vmul.f32 %v393, 199.8
        %v398 = vmul.f32 %v394, 199.8
        %v399 = vmul.f32 %v395, 199.8
        %v400 = vadd.f32 %v396, 0.2
        %v401 = vadd.f32 %v397, 0.2
        %v402 = vadd.f32 %v398, 0.2
        %v403 = vadd.f32 %v399, 0.2
        %v404 = vmul.f32 %v282, 0.2126
        %v405 = vmul.f32 %v283, 0.2126
        %v406 = vmul.f32 %v284, 0.2126
        %v407 = vmul.f32 %v285, 0.2126
        %v408 = vmul.f32 %v341, 0.7152
        %v409 = vmul.f32 %v342, 0.7152
        %v410 = vmul.f32 %v343, 0.7152
        %v411 = vmul.f32 %v344, 0.7152
        %v412 = vadd.f32 %v404, %v408
        %v413 = vadd.f32 %v405, %v409
        %v414 = vadd.f32 %v406, %v410
        %v415 = vadd.f32 %v407, %v411
        %v416 = vmul.f32 %v400, 0.0722
        %v417 = vmul.f32 %v401, 0.0722
        %v418 = vmul.f32 %v402, 0.0722
        %v419 = vmul.f32 %v403, 0.0722
        %v420 = vadd.f32 %v412, %v416
        %v421 = vadd.f32 %v413, %v417
        %v422 = vadd.f32 %v414, %v418
        %v423 = vadd.f32 %v415, %v419
        %v424 = vrcp.pop %v420
        %v425 = vrcp.pop %v421
        %v426 = vrcp.pop %v422
        %v427 = vrcp.pop %v423
        %v428 = vsub.f32 %v282, %v341
        %v429 = vsub.f32 %v283, %v342
        %v430 = vsub.f32 %v284, %v343
        %v431 = vsub.f32 %v285, %v344
        %v432 = vadd.f32 %v282, %v341
        %v433 = vadd.f32 %v283, %v342
        %v434 = vadd.f32 %v284, %v343
        %v435 = vadd.f32 %v285, %v344
        %v436 = vmul.f32 %v432, 0.5
        %v437 = vmul.f32 %v433, 0.5
        %v438 = vmul.f32 %v434, 0.5
        %v439 = vmul.f32 %v435, 0.5
        %v440 = vsub.f32 %v436, %v400
        %v441 = vsub.f32 %v437, %v401
        %v442 = vsub.f32 %v438, %v402
        %v443 = vsub.f32 %v439, %v403
        %v444 = vlog2.pop %v420
        %v445 = vmul.f32 %v444, 0.6931472
        %v446 = vlog2.pop %v421
        %v447 = vmul.f32 %v446, 0.6931472
        %v448 = vlog2.pop %v422
        %v449 = vmul.f32 %v448, 0.6931472
        %v450 = vlog2.pop %v423
        %v451 = vmul.f32 %v450, 0.6931472
        %v452 = vmul.f32 %v428, %v424
        %v453 = vmul.f32 %v429, %v425
        %v454 = vmul.f32 %v430, %v426
        %v455 = vmul.f32 %v431, %v427
        %v456 = vmul.f32 %v440, %v424
        %v457 = vmul.f32 %v441, %v425
        %v458 = vmul.f32 %v442, %v426
        %v459 = vmul.f32 %v443, %v427
        %v460 = vld [vmem:[%s198] sm:$0xf]
        %v461 = vld [vmem:[%s198 + $0x4] sm:$0xf]
        %v462 = vld [vmem:[%s198 + $0x8] sm:$0xf]
        %v463 = vld [vmem:[%s198 + $0xc] sm:$0xf]
        %v464 = vmax.bf16 %v460, 0
        %v465 = vmax.bf16 %v461, 0
        %v466 = vmax.bf16 %v462, 0
        %v467 = vmax.bf16 %v463, 0
        %v468 = vmin.bf16 %v464, 1065369472
        %v469 = vmin.bf16 %v465, 1065369472
        %v470 = vmin.bf16 %v466, 1065369472
        %v471 = vmin.bf16 %v467, 1065369472
        %v472 = vmax.bf16 %v468, 730672013
        %v473 = vmax.bf16 %v469, 730672013
        %v474 = vmax.bf16 %v470, 730672013
        %v475 = vmax.bf16 %v471, 730672013
        %v476 = vlog2.bf16.pop %v472
        %v478 = vmul.bf16 %v476, 1060192049
        %v479 = vlog2.bf16.pop %v473
        %v481 = vmul.bf16 %v479, 1060192049
        %v482 = vlog2.bf16.pop %v474
        %v484 = vmul.bf16 %v482, 1060192049
        %v485 = vlog2.bf16.pop %v475
        %v487 = vmul.bf16 %v485, 1060192049
        %v488 = vmul.bf16 %v478, 1074610189
        %v489 = vmul.bf16 %v481, 1074610189
        %v490 = vmul.bf16 %v484, 1074610189
        %v491 = vmul.bf16 %v487, 1074610189
        %v493 = vmul.bf16 %v488, 1069105081
        %v494 = vpow.bf16.pop %v493
        %v496 = vmul.bf16 %v489, 1069105081
        %v497 = vpow.bf16.pop %v496
        %v499 = vmul.bf16 %v490, 1069105081
        %v500 = vpow.bf16.pop %v499
        %v502 = vmul.bf16 %v491, 1069105081
        %v503 = vpow.bf16.pop %v502
        %v504 = vunpack.c.l.bf16 %v494
        %v505 = vunpack.c.l.bf16 %v497
        %v506 = vunpack.c.l.bf16 %v500
        %v507 = vunpack.c.l.bf16 %v503
        %v508 = vmul.f32 %v504, 199.8
        %v509 = vmul.f32 %v505, 199.8
        %v510 = vmul.f32 %v506, 199.8
        %v511 = vmul.f32 %v507, 199.8
        %v512 = vadd.f32 %v508, 0.2
        %v513 = vadd.f32 %v509, 0.2
        %v514 = vadd.f32 %v510, 0.2
        %v515 = vadd.f32 %v511, 0.2
        %s516 = smul.addr %s286, 4
        %s517 = scalar_lea.vmem %s198, %s516 [#allocation5]
        %v518 = vld [vmem:[%s517] sm:$0xf]
        %v519 = vld [vmem:[%s517 + $0x4] sm:$0xf]
        %v520 = vld [vmem:[%s517 + $0x8] sm:$0xf]
        %v521 = vld [vmem:[%s517 + $0xc] sm:$0xf]
        %v522 = vmax.bf16 %v518, 0
        %v523 = vmax.bf16 %v519, 0
        %v524 = vmax.bf16 %v520, 0
        %v525 = vmax.bf16 %v521, 0
        %v526 = vmin.bf16 %v522, 1065369472
        %v527 = vmin.bf16 %v523, 1065369472
        %v528 = vmin.bf16 %v524, 1065369472
        %v529 = vmin.bf16 %v525, 1065369472
        %v530 = vmax.bf16 %v526, 730672013
        %v531 = vmax.bf16 %v527, 730672013
        %v532 = vmax.bf16 %v528, 730672013
        %v533 = vmax.bf16 %v529, 730672013
        %v534 = vlog2.bf16.pop %v530
        %v536 = vmul.bf16 %v534, 1060192049
        %v537 = vlog2.bf16.pop %v531
        %v539 = vmul.bf16 %v537, 1060192049
        %v540 = vlog2.bf16.pop %v532
        %v542 = vmul.bf16 %v540, 1060192049
        %v543 = vlog2.bf16.pop %v533
        %v545 = vmul.bf16 %v543, 1060192049
        %v546 = vmul.bf16 %v536, 1074610189
        %v547 = vmul.bf16 %v539, 1074610189
        %v548 = vmul.bf16 %v542, 1074610189
        %v549 = vmul.bf16 %v545, 1074610189
        %v551 = vmul.bf16 %v546, 1069105081
        %v552 = vpow.bf16.pop %v551
        %v554 = vmul.bf16 %v547, 1069105081
        %v555 = vpow.bf16.pop %v554
        %v557 = vmul.bf16 %v548, 1069105081
        %v558 = vpow.bf16.pop %v557
        %v560 = vmul.bf16 %v549, 1069105081
        %v561 = vpow.bf16.pop %v560
        %v562 = vunpack.c.l.bf16 %v552
        %v563 = vunpack.c.l.bf16 %v555
        %v564 = vunpack.c.l.bf16 %v558
        %v565 = vunpack.c.l.bf16 %v561
        %v566 = vmul.f32 %v562, 199.8
        %v567 = vmul.f32 %v563, 199.8
        %v568 = vmul.f32 %v564, 199.8
        %v569 = vmul.f32 %v565, 199.8
        %v570 = vadd.f32 %v566, 0.2
        %v571 = vadd.f32 %v567, 0.2
        %v572 = vadd.f32 %v568, 0.2
        %v573 = vadd.f32 %v569, 0.2
        %s574 = smul.addr %s345, 4
        %s575 = scalar_lea.vmem %s198, %s574 [#allocation5]
        %v576 = vld [vmem:[%s575] sm:$0xf]
        %v577 = vld [vmem:[%s575 + $0x4] sm:$0xf]
        %v578 = vld [vmem:[%s575 + $0x8] sm:$0xf]
        %v579 = vld [vmem:[%s575 + $0xc] sm:$0xf]
        %v580 = vmax.bf16 %v576, 0
        %v581 = vmax.bf16 %v577, 0
        %v582 = vmax.bf16 %v578, 0
        %v583 = vmax.bf16 %v579, 0
        %v584 = vmin.bf16 %v580, 1065369472
        %v585 = vmin.bf16 %v581, 1065369472
        %v586 = vmin.bf16 %v582, 1065369472
        %v587 = vmin.bf16 %v583, 1065369472
        %v588 = vmax.bf16 %v584, 730672013
        %v589 = vmax.bf16 %v585, 730672013
        %v590 = vmax.bf16 %v586, 730672013
        %v591 = vmax.bf16 %v587, 730672013
        %v592 = vlog2.bf16.pop %v588
        %v594 = vmul.bf16 %v592, 1060192049
        %v595 = vlog2.bf16.pop %v589
        %v597 = vmul.bf16 %v595, 1060192049
        %v598 = vlog2.bf16.pop %v590
        %v600 = vmul.bf16 %v598, 1060192049
        %v601 = vlog2.bf16.pop %v591
        %v603 = vmul.bf16 %v601, 1060192049
        %v604 = vmul.bf16 %v594, 1074610189
        %v605 = vmul.bf16 %v597, 1074610189
        %v606 = vmul.bf16 %v600, 1074610189
        %v607 = vmul.bf16 %v603, 1074610189
        %v609 = vmul.bf16 %v604, 1069105081
        %v610 = vpow.bf16.pop %v609
        %v612 = vmul.bf16 %v605, 1069105081
        %v613 = vpow.bf16.pop %v612
        %v615 = vmul.bf16 %v606, 1069105081
        %v616 = vpow.bf16.pop %v615
        %v618 = vmul.bf16 %v607, 1069105081
        %v619 = vpow.bf16.pop %v618
        %v620 = vunpack.c.l.bf16 %v610
        %v621 = vunpack.c.l.bf16 %v613
        %v622 = vunpack.c.l.bf16 %v616
        %v623 = vunpack.c.l.bf16 %v619
        %v624 = vmul.f32 %v620, 199.8
        %v625 = vmul.f32 %v621, 199.8
        %v626 = vmul.f32 %v622, 199.8
        %v627 = vmul.f32 %v623, 199.8
        %v628 = vadd.f32 %v624, 0.2
        %v629 = vadd.f32 %v625, 0.2
        %v630 = vadd.f32 %v626, 0.2
        %v631 = vadd.f32 %v627, 0.2
        %v632 = vmul.f32 %v512, 0.2126
        %v633 = vmul.f32 %v513, 0.2126
        %v634 = vmul.f32 %v514, 0.2126
        %v635 = vmul.f32 %v515, 0.2126
        %v636 = vmul.f32 %v570, 0.7152
        %v637 = vmul.f32 %v571, 0.7152
        %v638 = vmul.f32 %v572, 0.7152
        %v639 = vmul.f32 %v573, 0.7152
        %v640 = vadd.f32 %v632, %v636
        %v641 = vadd.f32 %v633, %v637
        %v642 = vadd.f32 %v634, %v638
        %v643 = vadd.f32 %v635, %v639
        %v644 = vmul.f32 %v628, 0.0722
        %v645 = vmul.f32 %v629, 0.0722
        %v646 = vmul.f32 %v630, 0.0722
        %v647 = vmul.f32 %v631, 0.0722
        %v648 = vadd.f32 %v640, %v644
        %v649 = vadd.f32 %v641, %v645
        %v650 = vadd.f32 %v642, %v646
        %v651 = vadd.f32 %v643, %v647
        %v652 = vrcp.pop %v648
        %v653 = vrcp.pop %v649
        %v654 = vrcp.pop %v650
        %v655 = vrcp.pop %v651
        %v656 = vsub.f32 %v512, %v570
        %v657 = vsub.f32 %v513, %v571
        %v658 = vsub.f32 %v514, %v572
        %v659 = vsub.f32 %v515, %v573
        %v660 = vadd.f32 %v512, %v570
        %v661 = vadd.f32 %v513, %v571
        %v662 = vadd.f32 %v514, %v572
        %v663 = vadd.f32 %v515, %v573
        %v664 = vmul.f32 %v660, 0.5
        %v665 = vmul.f32 %v661, 0.5
        %v666 = vmul.f32 %v662, 0.5
        %v667 = vmul.f32 %v663, 0.5
        %v668 = vsub.f32 %v664, %v628
        %v669 = vsub.f32 %v665, %v629
        %v670 = vsub.f32 %v666, %v630
        %v671 = vsub.f32 %v667, %v631
        %v672 = vlog2.pop %v648
        %v673 = vmul.f32 %v672, 0.6931472
        %v674 = vlog2.pop %v649
        %v675 = vmul.f32 %v674, 0.6931472
        %v676 = vlog2.pop %v650
        %v677 = vmul.f32 %v676, 0.6931472
        %v678 = vlog2.pop %v651
        %v679 = vmul.f32 %v678, 0.6931472
        %v680 = vmul.f32 %v656, %v652
        %v681 = vmul.f32 %v657, %v653
        %v682 = vmul.f32 %v658, %v654
        %v683 = vmul.f32 %v659, %v655
        %v684 = vmul.f32 %v668, %v652
        %v685 = vmul.f32 %v669, %v653
        %v686 = vmul.f32 %v670, %v654
        %v687 = vmul.f32 %v671, %v655
        %v688 = vsub.f32 %v445, %v673
        %v689 = vsub.f32 %v447, %v675
        %v690 = vsub.f32 %v449, %v677
        %v691 = vsub.f32 %v451, %v679
        %v692 = vand.u32 2147483647, %v688
        %v693 = vand.u32 2147483647, %v689
        %v694 = vand.u32 2147483647, %v690
        %v695 = vand.u32 2147483647, %v691
        %v696 = vmul.f32 %v692, %v692
        %v697 = vmul.f32 %v693, %v693
        %v698 = vmul.f32 %v694, %v694
        %v699 = vmul.f32 %v695, %v695
        %v700 = vmul.f32 %v696, %v692
        %v701 = vmul.f32 %v697, %v693
        %v702 = vmul.f32 %v698, %v694
        %v703 = vmul.f32 %v699, %v695
        %v704 = vrsqrt.pop %v692
        %v705 = vmul.f32 %v692, %v704
        %vm706 = vcmp.eq.f32.partialorder %v692, inf
        %v707 = vsel %vm706, %v692, %v705
        %vm708 = vcmp.eq.f32.partialorder %v692, 0.0
        %v709 = vand.u32 %v692, 2147483648
        %v710 = vsel %vm708, %v709, %v707
        %v711 = vrsqrt.pop %v693
        %v712 = vmul.f32 %v693, %v711
        %vm713 = vcmp.eq.f32.partialorder %v693, inf
        %v714 = vsel %vm713, %v693, %v712
        %vm715 = vcmp.eq.f32.partialorder %v693, 0.0
        %v716 = vand.u32 %v693, 2147483648
        %v717 = vsel %vm715, %v716, %v714
        %v718 = vrsqrt.pop %v694
        %v719 = vmul.f32 %v694, %v718
        %vm720 = vcmp.eq.f32.partialorder %v694, inf
        %v721 = vsel %vm720, %v694, %v719
        %vm722 = vcmp.eq.f32.partialorder %v694, 0.0
        %v723 = vand.u32 %v694, 2147483648
        %v724 = vsel %vm722, %v723, %v721
        %v725 = vrsqrt.pop %v695
        %v726 = vmul.f32 %v695, %v725
        %vm727 = vcmp.eq.f32.partialorder %v695, inf
        %v728 = vsel %vm727, %v695, %v726
        %vm729 = vcmp.eq.f32.partialorder %v695, 0.0
        %v730 = vand.u32 %v695, 2147483648
        %v731 = vsel %vm729, %v730, %v728
        %v732 = vmul.f32 %v700, %v710
        %v733 = vmul.f32 %v701, %v717
        %v734 = vmul.f32 %v702, %v724
        %v735 = vmul.f32 %v703, %v731
        %v736 = vsub.f32 %v452, %v680
        %v737 = vsub.f32 %v453, %v681
        %v738 = vsub.f32 %v454, %v682
        %v739 = vsub.f32 %v455, %v683
        %v740 = vand.u32 2147483647, %v736
        %v741 = vand.u32 2147483647, %v737
        %v742 = vand.u32 2147483647, %v738
        %v743 = vand.u32 2147483647, %v739
        %v744 = vmul.f32 %v740, %v740
        %v745 = vmul.f32 %v741, %v741
        %v746 = vmul.f32 %v742, %v742
        %v747 = vmul.f32 %v743, %v743
        %v748 = vmul.f32 %v744, %v740
        %v749 = vmul.f32 %v745, %v741
        %v750 = vmul.f32 %v746, %v742
        %v751 = vmul.f32 %v747, %v743
        %v752 = vrsqrt.pop %v740
        %v753 = vmul.f32 %v740, %v752
        %vm754 = vcmp.eq.f32.partialorder %v740, inf
        %v755 = vsel %vm754, %v740, %v753
        %vm756 = vcmp.eq.f32.partialorder %v740, 0.0
        %v757 = vand.u32 %v740, 2147483648
        %v758 = vsel %vm756, %v757, %v755
        %v759 = vrsqrt.pop %v741
        %v760 = vmul.f32 %v741, %v759
        %vm761 = vcmp.eq.f32.partialorder %v741, inf
        %v762 = vsel %vm761, %v741, %v760
        %vm763 = vcmp.eq.f32.partialorder %v741, 0.0
        %v764 = vand.u32 %v741, 2147483648
        %v765 = vsel %vm763, %v764, %v762
        %v766 = vrsqrt.pop %v742
        %v767 = vmul.f32 %v742, %v766
        %vm768 = vcmp.eq.f32.partialorder %v742, inf
        %v769 = vsel %vm768, %v742, %v767
        %vm770 = vcmp.eq.f32.partialorder %v742, 0.0
        %v771 = vand.u32 %v742, 2147483648
        %v772 = vsel %vm770, %v771, %v769
        %v773 = vrsqrt.pop %v743
        %v774 = vmul.f32 %v743, %v773
        %vm775 = vcmp.eq.f32.partialorder %v743, inf
        %v776 = vsel %vm775, %v743, %v774
        %vm777 = vcmp.eq.f32.partialorder %v743, 0.0
        %v778 = vand.u32 %v743, 2147483648
        %v779 = vsel %vm777, %v778, %v776
        %v780 = vmul.f32 %v748, %v758
        %v781 = vmul.f32 %v749, %v765
        %v782 = vmul.f32 %v750, %v772
        %v783 = vmul.f32 %v751, %v779
        %v784 = vmul.f32 %v780, 0.35
        %v785 = vmul.f32 %v781, 0.35
        %v786 = vmul.f32 %v782, 0.35
        %v787 = vmul.f32 %v783, 0.35
        %v788 = vadd.f32 %v732, %v784
        %v789 = vadd.f32 %v733, %v785
        %v790 = vadd.f32 %v734, %v786
        %v791 = vadd.f32 %v735, %v787
        %v792 = vsub.f32 %v456, %v684
        %v793 = vsub.f32 %v457, %v685
        %v794 = vsub.f32 %v458, %v686
        %v795 = vsub.f32 %v459, %v687
        %v796 = vand.u32 2147483647, %v792
        %v797 = vand.u32 2147483647, %v793
        %v798 = vand.u32 2147483647, %v794
        %v799 = vand.u32 2147483647, %v795
        %v800 = vmul.f32 %v796, %v796
        %v801 = vmul.f32 %v797, %v797
        %v802 = vmul.f32 %v798, %v798
        %v803 = vmul.f32 %v799, %v799
        %v804 = vmul.f32 %v800, %v796
        %v805 = vmul.f32 %v801, %v797
        %v806 = vmul.f32 %v802, %v798
        %v807 = vmul.f32 %v803, %v799
        %v808 = vrsqrt.pop %v796
        %v809 = vmul.f32 %v796, %v808
        %vm810 = vcmp.eq.f32.partialorder %v796, inf
        %v811 = vsel %vm810, %v796, %v809
        %vm812 = vcmp.eq.f32.partialorder %v796, 0.0
        %v813 = vand.u32 %v796, 2147483648
        %v814 = vsel %vm812, %v813, %v811
        %v815 = vrsqrt.pop %v797
        %v816 = vmul.f32 %v797, %v815
        %vm817 = vcmp.eq.f32.partialorder %v797, inf
        %v818 = vsel %vm817, %v797, %v816
        %vm819 = vcmp.eq.f32.partialorder %v797, 0.0
        %v820 = vand.u32 %v797, 2147483648
        %v821 = vsel %vm819, %v820, %v818
        %v822 = vrsqrt.pop %v798
        %v823 = vmul.f32 %v798, %v822
        %vm824 = vcmp.eq.f32.partialorder %v798, inf
        %v825 = vsel %vm824, %v798, %v823
        %vm826 = vcmp.eq.f32.partialorder %v798, 0.0
        %v827 = vand.u32 %v798, 2147483648
        %v828 = vsel %vm826, %v827, %v825
        %v829 = vrsqrt.pop %v799
        %v830 = vmul.f32 %v799, %v829
        %vm831 = vcmp.eq.f32.partialorder %v799, inf
        %v832 = vsel %vm831, %v799, %v830
        %vm833 = vcmp.eq.f32.partialorder %v799, 0.0
        %v834 = vand.u32 %v799, 2147483648
        %v835 = vsel %vm833, %v834, %v832
        %v836 = vmul.f32 %v804, %v814
        %v837 = vmul.f32 %v805, %v821
        %v838 = vmul.f32 %v806, %v828
        %v839 = vmul.f32 %v807, %v835
        %v840 = vmul.f32 %v836, 0.35
        %v841 = vmul.f32 %v837, 0.35
        %v842 = vmul.f32 %v838, 0.35
        %v843 = vmul.f32 %v839, 0.35
        %v844 = vadd.f32 %v788, %v840
        %v845 = vadd.f32 %v789, %v841
        %v846 = vadd.f32 %v790, %v842
        %v847 = vadd.f32 %v791, %v843
        %v848 = vadd.f32 %v844, 0.0
        %v849 = vadd.f32 %v845, 0.0
        %v850 = vadd.f32 %v846, 0.0
        %v851 = vadd.f32 %v847, 0.0
        %852 = vst [vmem:[%s223] sm:$0xff] %v848
        %853 = vst [vmem:[%s223 + $0x8] sm:$0xff] %v849
        %854 = vst [vmem:[%s223 + $0x10] sm:$0xff] %v850
        %855 = vst [vmem:[%s223 + $0x18] sm:$0xff] %v851
        %s856 = sand.u32 %s100, 1
        %s857 = scalar_lea.sflag [#allocation4], %s856
        %s858 = sand.u32 %s100, 1
        %s859 = smul.addr %s858, 32
        %s860 = scalar_lea.vmem [#allocation7], %s859
        // Predicated region
        $region37: #{tpu_custom_call.1} parent=27 // pred_check
          %p861 = pneg %p110
        $region38: #{tpu_custom_call.1} parent=27 // pred_check_branch
          %863 = sbr.rel (%p861) target = $region40
        $region39: #{tpu_custom_call.1} parent=27 // pred_region
          %s865 = ssub.s32 512, 512
          %866 = vsyncadd %s857, %s865
          %s867 = smul.addr %s27, 4
          %s868 = smul.addr %s26, 4
          %s869 = sadd.s32 %s867, %s868
          %s870 = smul.addr %s869, 128
          %s871 = scalar_lea.hbm %s2, %s870
          %s872 = sshll.u32 %s860, 4
          %s873 = int_to_ptr.vmem [resolvable:$true] %s872
          %878 = dma.vmem_to_hbm [thread:$0]  %s873, 512, %s871, %s857, 128, 128, 8
        $region40: #{tpu_custom_call.1} parent=27 // pred_fallthru
          _
      $region28: #{tpu_custom_call.1} parent=5 // pred_fallthru
        _
      %p879 = scmp.le.s32.totalorder 2, %s17
      // Predicated region
      $region41: #{tpu_custom_call.1} parent=5 // pred_check
        %p880 = pneg %p879
      $region42: #{tpu_custom_call.1} parent=5 // pred_check_branch
        %882 = sbr.rel (%p880) target = $region44
      $region43: #{tpu_custom_call.1} parent=5 // pred_region
        %s883 = ssub.s32 %s17, 2
        // Predicated region
        $region45: #{tpu_custom_call.1} parent=43 // pred_check
          %p884 = pneg %p116
        $region46: #{tpu_custom_call.1} parent=43 // pred_check_branch
          %886 = sbr.rel (%p884) target = $region48
        $region47: #{tpu_custom_call.1} parent=43 // pred_region
          %s887 = sand.u32 %s101, 1
          %s888 = scalar_lea.sflag [#allocation4], %s887
          %s889 = sand.u32 %s101, 1
          %s890 = smul.addr %s889, 32
          %s891 = scalar_lea.vmem [#allocation7], %s890
          %892 = dma.done %s888, 512
        $region48: #{tpu_custom_call.1} parent=43 // pred_fallthru
          _
      $region44: #{tpu_custom_call.1} parent=5 // pred_fallthru
        _
    $region6: #{tpu_custom_call.1} parent=1 // loop_footer
      %s21 = sadd.s32 1, %s17
    $region7: #{tpu_custom_call.1} parent=1 // loop_footer_branch
      %16 = sbr.rel target = $region3
    $region8: #{tpu_custom_call.1} parent=1 // loop_exit
      _
    %893 = vsyncpa [#allocation3], 1
    %s894 = scalar_lea.sflag [#allocation3], 1
    %895 = vsyncpa %s894, 1
    %896 = vsyncpa [#allocation6], 1
    %s897 = scalar_lea.sflag [#allocation6], 1
    %898 = vsyncpa %s897, 1
    %899 = vsyncpa [#allocation4], 1
    %s900 = scalar_lea.sflag [#allocation4], 1
    %901 = vsyncpa %s900, 1

</llo_original>
